<compile_context>
chip_gen: v6e
topology: v6e:2x2x1
jax: 0.10.0
libtpu: 0.0.40
codegen_flags: <defaults>
</compile_context>

<pallas_src>
import functools

import jax
import jax.numpy as jnp
from jax import lax
from jax.experimental import pallas as pl
from jax.experimental.pallas import tpu as pltpu


def _round_up(x: int, m: int) -> int:
    return (x + m - 1) // m * m


def _w2v_kernel(center_idx_ref, ctx_idx_ref,      # scalar prefetch (SMEM, int32)
                center_tab_ref, ctx_tab_ref,      # VMEM-resident embedding tables
                out_ref,                          # (K+2, tb) f32 VMEM block
                center_buf, ctx_buf,              # VMEM scratch
                *, tb: int, k1: int, b_pad: int):
    """One B-tile: in-VMEM row gather -> per-group dot products + ssq."""
    i = pl.program_id(0)
    c_base = i * tb

    # ---- gather rows from the VMEM-resident tables (no DMA descriptors) -----
    # TODO(synk): vectorize this gather (jnp.take / one-hot MXU gather) once the
    # Mosaic dynamic-gather path is validated; the scalar loop is already far
    # cheaper than per-row HBM DMAs but still serializes tb*(K+2) row copies.
    def gather_center(j, carry):
        row = center_idx_ref[c_base + j]
        center_buf[pl.ds(j, 1), :] = center_tab_ref[pl.ds(row, 1), :]
        return carry

    lax.fori_loop(0, tb, gather_center, 0)

    for g in range(k1):                                  # static, K+1 is small
        def gather_ctx(j, carry, g=g):
            row = ctx_idx_ref[g * b_pad + c_base + j]
            ctx_buf[pl.ds(g * tb + j, 1), :] = ctx_tab_ref[pl.ds(row, 1), :]
            return carry

        lax.fori_loop(0, tb, gather_ctx, 0)

    # ---- compute in f32 regardless of table storage dtype (bf16 ok) ---------
    center = center_buf[...].astype(jnp.float32)          # (tb, D)
    ssq = jnp.sum(center * center, axis=-1)                # (tb,)

    rows = []
    for g in range(k1):
        # Static, sublane-aligned slice of the flat (k1*tb, D) scratch.
        blk = ctx_buf[g * tb:(g + 1) * tb, :].astype(jnp.float32)   # (tb, D)
        rows.append(jnp.sum(center * blk, axis=-1))                 # (tb,)
        ssq = ssq + jnp.sum(blk * blk, axis=-1)
    rows.append(ssq)

    # TODO(synk): for D >= 128 AND K+1 >= ~16 switch the per-group reductions to
    # a batched dot_general on the MXU; for small K the VPU path above wins.

    # Single merged, lane-dense store: (K+2, tb).
    out_ref[...] = jnp.stack(rows, axis=0)


def word2vec_forward(art_embed_w, lab_embed_w,
                     artist_idx, label_idx, noise_idxs,
                     neg_sampling_label=True, block_b=256):
    B, K = noise_idxs.shape
    D = art_embed_w.shape[1]
    k1 = K + 1

    # scores = art.lab is symmetric, so pick "center"/"context" tables such that
    # the other row AND all noise rows come from the SAME (context) table.
    if neg_sampling_label:
        center_tab, ctx_tab = art_embed_w, lab_embed_w
        center_idx, other_idx = artist_idx, label_idx
    else:
        center_tab, ctx_tab = lab_embed_w, art_embed_w
        center_idx, other_idx = label_idx, artist_idx

    # ---- B-tile size: whole batch if small, else a multiple of 128 ----------
    if B <= block_b:
        tb = B
    else:
        tb = max(128, (block_b // 128) * 128)
    b_pad = _round_up(B, tb)
    nt = b_pad // tb

    # ---- VMEM budget: resident tables + gather scratch + output blocks ------
    d_pad = _round_up(D, 128)

    def _tab_vmem(t):
        return _round_up(t.shape[0], 8) * d_pad * t.dtype.itemsize

    itemsize = max(center_tab.dtype.itemsize, ctx_tab.dtype.itemsize)
    table_vmem = 2 * (_tab_vmem(center_tab) + _tab_vmem(ctx_tab))   # 2x: BlockSpec buffering
    scratch_vmem = (_round_up(tb, 8) + _round_up(k1 * tb, 8)) * d_pad * itemsize
    out_vmem = 2 * _round_up(k1 + 1, 8) * _round_up(tb, 128) * 4
    needed = table_vmem + scratch_vmem + out_vmem + (2 << 20)

    if needed > (48 << 20):
        # TODO(synk): tables too large to stay resident in VMEM (v7x: 64 MiB/TC)
        # need a dedup/sorted chunked-DMA gather kernel; fall back to XLA ops.
        art_e = jnp.take(art_embed_w, artist_idx, axis=0)
        lab_e = jnp.take(lab_embed_w, label_idx, axis=0)
        noise_tab = lab_embed_w if neg_sampling_label else art_embed_w
        noise_e = jnp.take(noise_tab, noise_idxs, axis=0)
        scores = jnp.sum(art_e * lab_e, axis=1, keepdims=True)
        ctr = art_e if neg_sampling_label else lab_e
        noise_scores = jnp.sum(ctr[:, None, :] * noise_e, axis=2)
        all_e = jnp.concatenate([art_e[:, None], lab_e[:, None], noise_e], axis=1)
        embed_norm = jnp.mean(all_e.astype(jnp.float32) ** 2)
        return scores, noise_scores, embed_norm

    vmem_limit = int(min(max(needed + (8 << 20), 16 << 20), 60 << 20))

    # ---- index prep: group-major context indices, pad B to a tile multiple --
    center_idx = center_idx.astype(jnp.int32)                                  # (B,)
    ctx_idx2d = jnp.concatenate([other_idx[:, None], noise_idxs],
                                axis=1).astype(jnp.int32)                      # (B, K+1)
    if b_pad != B:
        pad = b_pad - B
        center_idx = jnp.concatenate([center_idx, jnp.zeros((pad,), jnp.int32)])
        ctx_idx2d = jnp.concatenate([ctx_idx2d, jnp.zeros((pad, k1), jnp.int32)], axis=0)
    # group-major: flat row g*b_pad + b -> group g (0 = other row, 1..K = noise)
    ctx_idx = ctx_idx2d.T.reshape(k1 * b_pad)

    kernel = functools.partial(_w2v_kernel, tb=tb, k1=k1, b_pad=b_pad)

    out = pl.pallas_call(
        kernel,
        out_shape=jax.ShapeDtypeStruct((k1 + 1, b_pad), jnp.float32),
        grid_spec=pltpu.PrefetchScalarGridSpec(
            num_scalar_prefetch=2,
            grid=(nt,),
            in_specs=[
                # Full tables, constant index_map -> DMA'd once, resident in VMEM.
                pl.BlockSpec(center_tab.shape, lambda i, ci, xi: (0, 0)),
                pl.BlockSpec(ctx_tab.shape, lambda i, ci, xi: (0, 0)),
            ],
            out_specs=pl.BlockSpec((k1 + 1, tb), lambda i, ci, xi: (0, i)),
            scratch_shapes=[
                pltpu.VMEM((tb, D), center_tab.dtype),      # gathered center rows
                pltpu.VMEM((k1 * tb, D), ctx_tab.dtype),    # gathered ctx rows (flat, group-major)
            ],
        ),
        compiler_params=pltpu.CompilerParams(
            dimension_semantics=("parallel",),   # independent B tiles -> both TCs on v7x
            vmem_limit_bytes=vmem_limit,
        ),
    )(center_idx, ctx_idx, center_tab, ctx_tab)

    scores = out[0, :B][:, None]                               # (B, 1)
    noise_scores = jnp.transpose(out[1:k1, :B])                # (B, K)
    inv_n = 1.0 / float(B * (K + 2) * D)                       # precomputed reciprocal
    embed_norm = jnp.sum(out[k1, :B]) * inv_n                  # mean(cat([art,lab,noise])**2)
    return scores, noise_scores, embed_norm


if __name__ == "__main__":
    key = jax.random.PRNGKey(0)
    n_artists, n_labels, embedding_dim = 50, 30, 32
    batch, n_noise = 8, 4

    k_art, k_lab, k_ai, k_li, k_ni = jax.random.split(key, 5)

    # Deterministic parameter init, matching uniform_(-0.5/D, 0.5/D).
    init_range = 0.5 / embedding_dim
    art_embed_w = jax.random.uniform(
        k_art, (n_artists, embedding_dim),
        minval=-init_range, maxval=init_range, dtype=jnp.float32)
    lab_embed_w = jax.random.uniform(
        k_lab, (n_labels, embedding_dim),
        minval=-init_range, maxval=init_range, dtype=jnp.float32)

    artist_idx = jax.random.randint(k_ai, (batch,), 0, n_artists, dtype=jnp.int32)
    label_idx = jax.random.randint(k_li, (batch,), 0, n_labels, dtype=jnp.int32)
    noise_idxs = jax.random.randint(k_ni, (batch, n_noise), 0, n_labels, dtype=jnp.int32)

    scores, noise_scores, embed_norm = word2vec_forward(
        art_embed_w, lab_embed_w, artist_idx, label_idx, noise_idxs,
        neg_sampling_label=True)
    jax.block_until_ready((scores, noise_scores, embed_norm))

    # Pure-JAX reference check (neg_sampling_label=True).
    art_e = jnp.take(art_embed_w, artist_idx, axis=0)
    lab_e = jnp.take(lab_embed_w, label_idx, axis=0)
    noise_e = jnp.take(lab_embed_w, noise_idxs, axis=0)
    ref_scores = jnp.sum(art_e * lab_e, axis=1, keepdims=True)
    ref_noise_scores = jnp.sum(art_e[:, None, :] * noise_e, axis=2)
    all_e = jnp.concatenate([art_e[:, None], lab_e[:, None], noise_e], axis=1)
    ref_norm = jnp.mean(all_e ** 2)

    assert scores.shape == (batch, 1)
    assert noise_scores.shape == (batch, n_noise)
    assert embed_norm.shape == ()
    assert jnp.allclose(scores, ref_scores, atol=1e-6)
    assert jnp.allclose(noise_scores, ref_noise_scores, atol=1e-6)
    assert jnp.allclose(embed_norm, ref_norm, atol=1e-6)

    # neg_sampling_label=False branch (noise rows drawn from the artist table).
    scores_f, noise_scores_f, embed_norm_f = word2vec_forward(
        art_embed_w, lab_embed_w, artist_idx, label_idx, noise_idxs,
        neg_sampling_label=False)
    jax.block_until_ready((scores_f, noise_scores_f, embed_norm_f))

    noise_e_f = jnp.take(art_embed_w, noise_idxs, axis=0)
    ref_noise_f = jnp.sum(lab_e[:, None, :] * noise_e_f, axis=2)
    all_e_f = jnp.concatenate([art_e[:, None], lab_e[:, None], noise_e_f], axis=1)
    ref_norm_f = jnp.mean(all_e_f ** 2)

    assert jnp.allclose(scores_f, ref_scores, atol=1e-6)
    assert jnp.allclose(noise_scores_f, ref_noise_f, atol=1e-6)
    assert jnp.allclose(embed_norm_f, ref_norm_f, atol=1e-6)

    print("KERNEL_OK")
</pallas_src>

<mosaic_0001>
module attributes {stable_mosaic.version = 11 : i64} {
  func.func @_w2v_kernel(%arg0: i32, %arg1: memref<8xi32, #tpu.memory_space<smem>>, %arg2: memref<40xi32, #tpu.memory_space<smem>>, %arg3: memref<50x32xf32, #tpu.memory_space<vmem>>, %arg4: memref<30x32xf32, #tpu.memory_space<vmem>>, %arg5: memref<6x8xf32, #tpu.memory_space<vmem>>, %arg6: memref<8x32xf32, #tpu.memory_space<vmem>>, %arg7: memref<40x32xf32, #tpu.memory_space<vmem>>) attributes {dimension_semantics = [#tpu.dimension_semantics<parallel>], iteration_bounds = array<i64: 1>, scalar_prefetch = 2 : i64, scratch_operands = 2 : i64, tpu.core_type = #tpu.core_type<tc>, window_params = [{pipeline_mode = #tpu.pipeline_mode<synchronous>, transform_indices = @transform_0, window_bounds = array<i64: 50, 32>}, {pipeline_mode = #tpu.pipeline_mode<synchronous>, transform_indices = @transform_1, window_bounds = array<i64: 30, 32>}, {transform_indices = @transform_2, window_bounds = array<i64: 6, 8>}]} {
    %c8_i32 = arith.constant 8 : i32
    %0 = arith.muli %arg0, %c8_i32 : i32
    %c0_i32 = arith.constant 0 : i32
    %c8_i32_0 = arith.constant 8 : i32
    %1 = arith.addi %c0_i32, %c8_i32_0 : i32
    %c1_i32 = arith.constant 1 : i32
    scf.for %arg8 = %c0_i32 to %1 step %c1_i32  : i32 {
      %48 = arith.addi %0, %arg8 : i32
      %49 = arith.index_cast %48 : i32 to index
      %50 = memref.load %arg1[%49] : memref<8xi32, #tpu.memory_space<smem>>
      %51 = arith.index_cast %50 : i32 to index
      %c0_41 = arith.constant 0 : index
      %52 = vector.load %arg3[%51, %c0_41] : memref<50x32xf32, #tpu.memory_space<vmem>>, vector<1x32xf32>
      %53 = arith.index_cast %arg8 : i32 to index
      %c0_42 = arith.constant 0 : index
      %54 = vector.load %arg6[%53, %c0_42] : memref<8x32xf32, #tpu.memory_space<vmem>>, vector<1x32xf32>
      tpu.vector_store %arg6[%53, %c0_42], %52 {strides = array<i32>} : memref<8x32xf32, #tpu.memory_space<vmem>>, vector<1x32xf32>,
    }
    %c8_i32_1 = arith.constant 8 : i32
    %c0_i32_2 = arith.constant 0 : i32
    %c8_i32_3 = arith.constant 8 : i32
    %2 = arith.addi %c0_i32_2, %c8_i32_3 : i32
    %c1_i32_4 = arith.constant 1 : i32
    scf.for %arg8 = %c0_i32_2 to %2 step %c1_i32_4  : i32 {
      %c0_i32_41 = arith.constant 0 : i32
      %48 = arith.addi %c0_i32_41, %0 : i32
      %49 = arith.addi %48, %arg8 : i32
      %50 = arith.index_cast %49 : i32 to index
      %51 = memref.load %arg2[%50] : memref<40xi32, #tpu.memory_space<smem>>
      %52 = arith.index_cast %51 : i32 to index
      %c0_42 = arith.constant 0 : index
      %53 = vector.load %arg4[%52, %c0_42] : memref<30x32xf32, #tpu.memory_space<vmem>>, vector<1x32xf32>
      %c0_i32_43 = arith.constant 0 : i32
      %54 = arith.addi %c0_i32_43, %arg8 : i32
      %55 = arith.index_cast %54 : i32 to index
      %c0_44 = arith.constant 0 : index
      %56 = vector.load %arg7[%55, %c0_44] : memref<40x32xf32, #tpu.memory_space<vmem>>, vector<1x32xf32>
      tpu.vector_store %arg7[%55, %c0_44], %53 {strides = array<i32>} : memref<40x32xf32, #tpu.memory_space<vmem>>, vector<1x32xf32>,
    }
    %c8_i32_5 = arith.constant 8 : i32
    %c0_i32_6 = arith.constant 0 : i32
    %c8_i32_7 = arith.constant 8 : i32
    %3 = arith.addi %c0_i32_6, %c8_i32_7 : i32
    %c1_i32_8 = arith.constant 1 : i32
    scf.for %arg8 = %c0_i32_6 to %3 step %c1_i32_8  : i32 {
      %c8_i32_41 = arith.constant 8 : i32
      %48 = arith.addi %c8_i32_41, %0 : i32
      %49 = arith.addi %48, %arg8 : i32
      %50 = arith.index_cast %49 : i32 to index
      %51 = memref.load %arg2[%50] : memref<40xi32, #tpu.memory_space<smem>>
      %52 = arith.index_cast %51 : i32 to index
      %c0_42 = arith.constant 0 : index
      %53 = vector.load %arg4[%52, %c0_42] : memref<30x32xf32, #tpu.memory_space<vmem>>, vector<1x32xf32>
      %c8_i32_43 = arith.constant 8 : i32
      %54 = arith.addi %c8_i32_43, %arg8 : i32
      %55 = arith.index_cast %54 : i32 to index
      %c0_44 = arith.constant 0 : index
      %56 = vector.load %arg7[%55, %c0_44] : memref<40x32xf32, #tpu.memory_space<vmem>>, vector<1x32xf32>
      tpu.vector_store %arg7[%55, %c0_44], %53 {strides = array<i32>} : memref<40x32xf32, #tpu.memory_space<vmem>>, vector<1x32xf32>,
    }
    %c8_i32_9 = arith.constant 8 : i32
    %c0_i32_10 = arith.constant 0 : i32
    %c8_i32_11 = arith.constant 8 : i32
    %4 = arith.addi %c0_i32_10, %c8_i32_11 : i32
    %c1_i32_12 = arith.constant 1 : i32
    scf.for %arg8 = %c0_i32_10 to %4 step %c1_i32_12  : i32 {
      %c16_i32 = arith.constant 16 : i32
      %48 = arith.addi %c16_i32, %0 : i32
      %49 = arith.addi %48, %arg8 : i32
      %50 = arith.index_cast %49 : i32 to index
      %51 = memref.load %arg2[%50] : memref<40xi32, #tpu.memory_space<smem>>
      %52 = arith.index_cast %51 : i32 to index
      %c0_41 = arith.constant 0 : index
      %53 = vector.load %arg4[%52, %c0_41] : memref<30x32xf32, #tpu.memory_space<vmem>>, vector<1x32xf32>
      %c16_i32_42 = arith.constant 16 : i32
      %54 = arith.addi %c16_i32_42, %arg8 : i32
      %55 = arith.index_cast %54 : i32 to index
      %c0_43 = arith.constant 0 : index
      %56 = vector.load %arg7[%55, %c0_43] : memref<40x32xf32, #tpu.memory_space<vmem>>, vector<1x32xf32>
      tpu.vector_store %arg7[%55, %c0_43], %53 {strides = array<i32>} : memref<40x32xf32, #tpu.memory_space<vmem>>, vector<1x32xf32>,
    }
    %c8_i32_13 = arith.constant 8 : i32
    %c0_i32_14 = arith.constant 0 : i32
    %c8_i32_15 = arith.constant 8 : i32
    %5 = arith.addi %c0_i32_14, %c8_i32_15 : i32
    %c1_i32_16 = arith.constant 1 : i32
    scf.for %arg8 = %c0_i32_14 to %5 step %c1_i32_16  : i32 {
      %c24_i32 = arith.constant 24 : i32
      %48 = arith.addi %c24_i32, %0 : i32
      %49 = arith.addi %48, %arg8 : i32
      %50 = arith.index_cast %49 : i32 to index
      %51 = memref.load %arg2[%50] : memref<40xi32, #tpu.memory_space<smem>>
      %52 = arith.index_cast %51 : i32 to index
      %c0_41 = arith.constant 0 : index
      %53 = vector.load %arg4[%52, %c0_41] : memref<30x32xf32, #tpu.memory_space<vmem>>, vector<1x32xf32>
      %c24_i32_42 = arith.constant 24 : i32
      %54 = arith.addi %c24_i32_42, %arg8 : i32
      %55 = arith.index_cast %54 : i32 to index
      %c0_43 = arith.constant 0 : index
      %56 = vector.load %arg7[%55, %c0_43] : memref<40x32xf32, #tpu.memory_space<vmem>>, vector<1x32xf32>
      tpu.vector_store %arg7[%55, %c0_43], %53 {strides = array<i32>} : memref<40x32xf32, #tpu.memory_space<vmem>>, vector<1x32xf32>,
    }
    %c8_i32_17 = arith.constant 8 : i32
    %c0_i32_18 = arith.constant 0 : i32
    %c8_i32_19 = arith.constant 8 : i32
    %6 = arith.addi %c0_i32_18, %c8_i32_19 : i32
    %c1_i32_20 = arith.constant 1 : i32
    scf.for %arg8 = %c0_i32_18 to %6 step %c1_i32_20  : i32 {
      %c32_i32 = arith.constant 32 : i32
      %48 = arith.addi %c32_i32, %0 : i32
      %49 = arith.addi %48, %arg8 : i32
      %50 = arith.index_cast %49 : i32 to index
      %51 = memref.load %arg2[%50] : memref<40xi32, #tpu.memory_space<smem>>
      %52 = arith.index_cast %51 : i32 to index
      %c0_41 = arith.constant 0 : index
      %53 = vector.load %arg4[%52, %c0_41] : memref<30x32xf32, #tpu.memory_space<vmem>>, vector<1x32xf32>
      %c32_i32_42 = arith.constant 32 : i32
      %54 = arith.addi %c32_i32_42, %arg8 : i32
      %55 = arith.index_cast %54 : i32 to index
      %c0_43 = arith.constant 0 : index
      %56 = vector.load %arg7[%55, %c0_43] : memref<40x32xf32, #tpu.memory_space<vmem>>, vector<1x32xf32>
      tpu.vector_store %arg7[%55, %c0_43], %53 {strides = array<i32>} : memref<40x32xf32, #tpu.memory_space<vmem>>, vector<1x32xf32>,
    }
    %c8_i32_21 = arith.constant 8 : i32
    %c0 = arith.constant 0 : index
    %c0_22 = arith.constant 0 : index
    %7 = vector.load %arg6[%c0, %c0_22] : memref<8x32xf32, #tpu.memory_space<vmem>>, vector<8x32xf32>
    %8 = arith.mulf %7, %7 : vector<8x32xf32>
    %cst = arith.constant dense<0.000000e+00> : vector<8xf32>
    %9 = vector.multi_reduction <add>, %8, %cst [1] : vector<8x32xf32> to vector<8xf32>
    %c0_23 = arith.constant 0 : index
    %c0_24 = arith.constant 0 : index
    %10 = vector.load %arg7[%c0_23, %c0_24] : memref<40x32xf32, #tpu.memory_space<vmem>>, vector<8x32xf32>
    %11 = arith.mulf %7, %10 : vector<8x32xf32>
    %cst_25 = arith.constant dense<0.000000e+00> : vector<8xf32>
    %12 = vector.multi_reduction <add>, %11, %cst_25 [1] : vector<8x32xf32> to vector<8xf32>
    %13 = arith.mulf %10, %10 : vector<8x32xf32>
    %cst_26 = arith.constant dense<0.000000e+00> : vector<8xf32>
    %14 = vector.multi_reduction <add>, %13, %cst_26 [1] : vector<8x32xf32> to vector<8xf32>
    %15 = arith.addf %9, %14 : vector<8xf32>
    %c8 = arith.constant 8 : index
    %c0_27 = arith.constant 0 : index
    %16 = vector.load %arg7[%c8, %c0_27] : memref<40x32xf32, #tpu.memory_space<vmem>>, vector<8x32xf32>
    %17 = arith.mulf %7, %16 : vector<8x32xf32>
    %cst_28 = arith.constant dense<0.000000e+00> : vector<8xf32>
    %18 = vector.multi_reduction <add>, %17, %cst_28 [1] : vector<8x32xf32> to vector<8xf32>
    %19 = arith.mulf %16, %16 : vector<8x32xf32>
    %cst_29 = arith.constant dense<0.000000e+00> : vector<8xf32>
    %20 = vector.multi_reduction <add>, %19, %cst_29 [1] : vector<8x32xf32> to vector<8xf32>
    %21 = arith.addf %15, %20 : vector<8xf32>
    %c16 = arith.constant 16 : index
    %c0_30 = arith.constant 0 : index
    %22 = vector.load %arg7[%c16, %c0_30] : memref<40x32xf32, #tpu.memory_space<vmem>>, vector<8x32xf32>
    %23 = arith.mulf %7, %22 : vector<8x32xf32>
    %cst_31 = arith.constant dense<0.000000e+00> : vector<8xf32>
    %24 = vector.multi_reduction <add>, %23, %cst_31 [1] : vector<8x32xf32> to vector<8xf32>
    %25 = arith.mulf %22, %22 : vector<8x32xf32>
    %cst_32 = arith.constant dense<0.000000e+00> : vector<8xf32>
    %26 = vector.multi_reduction <add>, %25, %cst_32 [1] : vector<8x32xf32> to vector<8xf32>
    %27 = arith.addf %21, %26 : vector<8xf32>
    %c24 = arith.constant 24 : index
    %c0_33 = arith.constant 0 : index
    %28 = vector.load %arg7[%c24, %c0_33] : memref<40x32xf32, #tpu.memory_space<vmem>>, vector<8x32xf32>
    %29 = arith.mulf %7, %28 : vector<8x32xf32>
    %cst_34 = arith.constant dense<0.000000e+00> : vector<8xf32>
    %30 = vector.multi_reduction <add>, %29, %cst_34 [1] : vector<8x32xf32> to vector<8xf32>
    %31 = arith.mulf %28, %28 : vector<8x32xf32>
    %cst_35 = arith.constant dense<0.000000e+00> : vector<8xf32>
    %32 = vector.multi_reduction <add>, %31, %cst_35 [1] : vector<8x32xf32> to vector<8xf32>
    %33 = arith.addf %27, %32 : vector<8xf32>
    %c32 = arith.constant 32 : index
    %c0_36 = arith.constant 0 : index
    %34 = vector.load %arg7[%c32, %c0_36] : memref<40x32xf32, #tpu.memory_space<vmem>>, vector<8x32xf32>
    %35 = arith.mulf %7, %34 : vector<8x32xf32>
    %cst_37 = arith.constant dense<0.000000e+00> : vector<8xf32>
    %36 = vector.multi_reduction <add>, %35, %cst_37 [1] : vector<8x32xf32> to vector<8xf32>
    %37 = arith.mulf %34, %34 : vector<8x32xf32>
    %cst_38 = arith.constant dense<0.000000e+00> : vector<8xf32>
    %38 = vector.multi_reduction <add>, %37, %cst_38 [1] : vector<8x32xf32> to vector<8xf32>
    %39 = arith.addf %33, %38 : vector<8xf32>
    %40 = vector.shape_cast %12 : vector<8xf32> to vector<1x8xf32>
    %41 = vector.shape_cast %18 : vector<8xf32> to vector<1x8xf32>
    %42 = vector.shape_cast %24 : vector<8xf32> to vector<1x8xf32>
    %43 = vector.shape_cast %30 : vector<8xf32> to vector<1x8xf32>
    %44 = vector.shape_cast %36 : vector<8xf32> to vector<1x8xf32>
    %45 = vector.shape_cast %39 : vector<8xf32> to vector<1x8xf32>
    %46 = tpu.concatenate %40, %41, %42, %43, %44, %45 in 0 : vector<1x8xf32>, vector<1x8xf32>, vector<1x8xf32>, vector<1x8xf32>, vector<1x8xf32>, vector<1x8xf32> -> vector<6x8xf32>
    %c0_39 = arith.constant 0 : index
    %c0_40 = arith.constant 0 : index
    %47 = vector.load %arg5[%c0_39, %c0_40] : memref<6x8xf32, #tpu.memory_space<vmem>>, vector<6x8xf32>
    tpu.vector_store %arg5[%c0_39, %c0_40], %46 {strides = array<i32>} : memref<6x8xf32, #tpu.memory_space<vmem>>, vector<6x8xf32>,
    return
  }
  func.func @transform_0(%arg0: i32, %arg1: memref<8xi32, #tpu.memory_space<smem>>, %arg2: memref<40xi32, #tpu.memory_space<smem>>) -> (i32, i32) {
    %c0_i32 = arith.constant 0 : i32
    %c0_i32_0 = arith.constant 0 : i32
    %c0_i32_1 = arith.constant 0 : i32
    return %c0_i32, %c0_i32_0 : i32, i32
  }
  func.func @transform_1(%arg0: i32, %arg1: memref<8xi32, #tpu.memory_space<smem>>, %arg2: memref<40xi32, #tpu.memory_space<smem>>) -> (i32, i32) {
    %c0_i32 = arith.constant 0 : i32
    %c0_i32_0 = arith.constant 0 : i32
    %c0_i32_1 = arith.constant 0 : i32
    return %c0_i32, %c0_i32_0 : i32, i32
  }
  func.func @transform_2(%arg0: i32, %arg1: memref<8xi32, #tpu.memory_space<smem>>, %arg2: memref<40xi32, #tpu.memory_space<smem>>) -> (i32, i32) {
    %c0_i32 = arith.constant 0 : i32
    %c0_i32_0 = arith.constant 0 : i32
    return %c0_i32, %arg0 : i32, i32
  }
}

</mosaic_0001>

<llo_original>
// kernel: tpu_custom_call.1
$region0: #{tpu_custom_call.1}
  #allocation0 [shape = 'u32[]', space=smem, size = 0x4, offset = 0x4, fixed_abs, tag = 'smem constant byte address 0x4 - core index']
  #allocation1 [shape = 'u32[144,128]{1,0:T(1,128)}', space=vmem, size = 0x12000, scoped, tag = 'internal scratch']
  #allocation2 [shape = 'f32[8,32]{1,0:T(8,128)}', space=vmem, size = 0x1000, scoped, tag = 'scratch operand']
  #allocation3 [shape = 'f32[40,32]{1,0:T(8,128)}', space=vmem, size = 0x5000, scoped, tag = 'scratch operand']
  #allocation4 [shape = 's32[1]{0}', space=sflag, size = 0x4, scoped, tag = 'scoped memory for tpu_custom_call.1']
  #allocation5 [shape = 'u8[512]{0}', space=smem, size = 0x200, scoped, tag = 'prefetched SMEM operand 0']
  #allocation6 [shape = 'u8[512]{0}', space=smem, size = 0x200, scoped, tag = 'prefetched SMEM operand 1']
  %s0 = inlined_call_operand.vmem [shape: s32[8], index: 0, kind: input, shape index: {}]
  %s1 = inlined_call_operand.vmem [shape: s32[40], index: 1, kind: input, shape index: {}]
  %s2 = inlined_call_operand.vmem [shape: f32[50,32], index: 2, kind: input, shape index: {}]
  %s3 = inlined_call_operand.vmem [shape: f32[30,32], index: 3, kind: input, shape index: {}]
  %s4 = inlined_call_operand.hbm [shape: f32[6,8], index: 4, kind: output, shape index: {}]
  %s5 = sld [smem:[#allocation0]]
  $region60: #{tpu_custom_call.1} parent=0
    _
  %s7 = ssub.s32 1, %s5
  %s8 = scalar_select 0, %s7, %s5
  %s9 = sshll.u32 %s0, 4
  %s10 = int_to_ptr.vmem [resolvable:$true] %s9
  %12 = dma.vmem_to_smem %s10, 16, [#allocation5], [#allocation4]
  %s13 = sshll.u32 %s1, 4
  %s14 = int_to_ptr.vmem [resolvable:$true] %s13
  %16 = dma.vmem_to_smem %s14, 16, [#allocation6], [#allocation4]
  %17 = dma.done [#allocation4], 32
  %18 = sfence
  $region1: #{tpu_custom_call.1} parent=0
    #allocation7 [shape = 'u8[4096]{0}', space=vmem, size = 0x1000, scoped, tag = 'output window, operand 0, single buffered']
    #allocation8 [shape = 's32[1]{0}', space=sflag, size = 0x4, scoped, tag = 'scoped memory for tpu_custom_call.1']
    %19 = vsyncpa [#allocation8], 0
    // Predicated region
    $region2: #{tpu_custom_call.1} parent=1 // pred_check
      _
    $region3: #{tpu_custom_call.1} parent=1 // pred_check_branch
      %21 = sbr.rel (0) target = $region5
    $region4: #{tpu_custom_call.1} parent=1 // pred_region
      _
    $region5: #{tpu_custom_call.1} parent=1 // pred_fallthru
      _
    // Predicated region
    $region6: #{tpu_custom_call.1} parent=1 // pred_check
      _
    $region7: #{tpu_custom_call.1} parent=1 // pred_check_branch
      %23 = sbr.rel (0) target = $region9
    $region8: #{tpu_custom_call.1} parent=1 // pred_region
      _
    $region9: #{tpu_custom_call.1} parent=1 // pred_fallthru
      _
    %s24 = smul.u32 0, 8
    loop: start=0, step=1, limit=8
    $region10: #{tpu_custom_call.1} parent=1 // loop_pre_header
      _
    $region11: #{tpu_custom_call.1} parent=1 // loop_header
      %s26 = sphi 0, %s30
      %p27 = scmp.ge.s32.totalorder %s26, 8
    $region12: #{tpu_custom_call.1} parent=1 // loop_header_branch
      %29 = sbr.rel (%p27) target = $region16
    $region13: #{tpu_custom_call.1} parent=1 // loop_body
      %s31 = sadd.s32 %s24, %s26
      %s32 = sld [smem:[#allocation5 + %s31]]
      %s33 = scalar_lea.vmem %s2, %s32
      %v34 = vld [vmem:[%s33] sm:$0x1]
      %s35 = scalar_lea.vmem [#allocation2], %s26
      %vm36 = vcmask 253952
      %37 = vst.msk [vmem:[%s35] sm:$0x1] %vm36, %v34
    $region14: #{tpu_custom_call.1} parent=1 // loop_footer
      %s30 = sadd.s32 1, %s26
    $region15: #{tpu_custom_call.1} parent=1 // loop_footer_branch
      %25 = sbr.rel target = $region11
    $region16: #{tpu_custom_call.1} parent=1 // loop_exit
      _
    loop: start=0, step=1, limit=8
    $region17: #{tpu_custom_call.1} parent=1 // loop_pre_header
      _
    $region18: #{tpu_custom_call.1} parent=1 // loop_header
      %s39 = sphi 0, %s43
      %p40 = scmp.ge.s32.totalorder %s39, 8
    $region19: #{tpu_custom_call.1} parent=1 // loop_header_branch
      %42 = sbr.rel (%p40) target = $region23
    $region20: #{tpu_custom_call.1} parent=1 // loop_body
      %s44 = sadd.s32 %s24, %s39
      %s45 = sld [smem:[#allocation6 + %s44]]
      %s46 = scalar_lea.vmem %s3, %s45
      %v47 = vld [vmem:[%s46] sm:$0x1]
      %s48 = scalar_lea.vmem [#allocation3], %s39
      %vm49 = vcmask 253952
      %50 = vst.msk [vmem:[%s48] sm:$0x1] %vm49, %v47
    $region21: #{tpu_custom_call.1} parent=1 // loop_footer
      %s43 = sadd.s32 1, %s39
    $region22: #{tpu_custom_call.1} parent=1 // loop_footer_branch
      %38 = sbr.rel target = $region18
    $region23: #{tpu_custom_call.1} parent=1 // loop_exit
      _
    loop: start=0, step=1, limit=8
    $region24: #{tpu_custom_call.1} parent=1 // loop_pre_header
      _
    $region25: #{tpu_custom_call.1} parent=1 // loop_header
      %s52 = sphi 0, %s56
      %p53 = scmp.ge.s32.totalorder %s52, 8
    $region26: #{tpu_custom_call.1} parent=1 // loop_header_branch
      %55 = sbr.rel (%p53) target = $region30
    $region27: #{tpu_custom_call.1} parent=1 // loop_body
      %s57 = sadd.s32 %s24, 8
      %s58 = sadd.s32 %s57, %s52
      %s59 = sld [smem:[#allocation6 + %s58]]
      %s60 = scalar_lea.vmem %s3, %s59
      %v61 = vld [vmem:[%s60] sm:$0x1]
      %s62 = sadd.s32 %s52, 8
      %s63 = scalar_lea.vmem [#allocation3], %s62
      %vm64 = vcmask 253952
      %65 = vst.msk [vmem:[%s63] sm:$0x1] %vm64, %v61
    $region28: #{tpu_custom_call.1} parent=1 // loop_footer
      %s56 = sadd.s32 1, %s52
    $region29: #{tpu_custom_call.1} parent=1 // loop_footer_branch
      %51 = sbr.rel target = $region25
    $region30: #{tpu_custom_call.1} parent=1 // loop_exit
      _
    loop: start=0, step=1, limit=8
    $region31: #{tpu_custom_call.1} parent=1 // loop_pre_header
      _
    $region32: #{tpu_custom_call.1} parent=1 // loop_header
      %s67 = sphi 0, %s71
      %p68 = scmp.ge.s32.totalorder %s67, 8
    $region33: #{tpu_custom_call.1} parent=1 // loop_header_branch
      %70 = sbr.rel (%p68) target = $region37
    $region34: #{tpu_custom_call.1} parent=1 // loop_body
      %s72 = sadd.s32 %s24, 16
      %s73 = sadd.s32 %s72, %s67
      %s74 = sld [smem:[#allocation6 + %s73]]
      %s75 = scalar_lea.vmem %s3, %s74
      %v76 = vld [vmem:[%s75] sm:$0x1]
      %s77 = sadd.s32 %s67, 16
      %s78 = scalar_lea.vmem [#allocation3], %s77
      %vm79 = vcmask 253952
      %80 = vst.msk [vmem:[%s78] sm:$0x1] %vm79, %v76
    $region35: #{tpu_custom_call.1} parent=1 // loop_footer
      %s71 = sadd.s32 1, %s67
    $region36: #{tpu_custom_call.1} parent=1 // loop_footer_branch
      %66 = sbr.rel target = $region32
    $region37: #{tpu_custom_call.1} parent=1 // loop_exit
      _
    loop: start=0, step=1, limit=8
    $region38: #{tpu_custom_call.1} parent=1 // loop_pre_header
      _
    $region39: #{tpu_custom_call.1} parent=1 // loop_header
      %s82 = sphi 0, %s86
      %p83 = scmp.ge.s32.totalorder %s82, 8
    $region40: #{tpu_custom_call.1} parent=1 // loop_header_branch
      %85 = sbr.rel (%p83) target = $region44
    $region41: #{tpu_custom_call.1} parent=1 // loop_body
      %s87 = sadd.s32 %s24, 24
      %s88 = sadd.s32 %s87, %s82
      %s89 = sld [smem:[#allocation6 + %s88]]
      %s90 = scalar_lea.vmem %s3, %s89
      %v91 = vld [vmem:[%s90] sm:$0x1]
      %s92 = sadd.s32 %s82, 24
      %s93 = scalar_lea.vmem [#allocation3], %s92
      %vm94 = vcmask 253952
      %95 = vst.msk [vmem:[%s93] sm:$0x1] %vm94, %v91
    $region42: #{tpu_custom_call.1} parent=1 // loop_footer
      %s86 = sadd.s32 1, %s82
    $region43: #{tpu_custom_call.1} parent=1 // loop_footer_branch
      %81 = sbr.rel target = $region39
    $region44: #{tpu_custom_call.1} parent=1 // loop_exit
      _
    loop: start=0, step=1, limit=8
    $region45: #{tpu_custom_call.1} parent=1 // loop_pre_header
      _
    $region46: #{tpu_custom_call.1} parent=1 // loop_header
      %s97 = sphi 0, %s101
      %p98 = scmp.ge.s32.totalorder %s97, 8
    $region47: #{tpu_custom_call.1} parent=1 // loop_header_branch
      %100 = sbr.rel (%p98) target = $region51
    $region48: #{tpu_custom_call.1} parent=1 // loop_body
      %s102 = sadd.s32 %s24, 32
      %s103 = sadd.s32 %s102, %s97
      %s104 = sld [smem:[#allocation6 + %s103]]
      %s105 = scalar_lea.vmem %s3, %s104
      %v106 = vld [vmem:[%s105] sm:$0x1]
      %s107 = sadd.s32 %s97, 32
      %s108 = scalar_lea.vmem [#allocation3], %s107
      %vm109 = vcmask 253952
      %110 = vst.msk [vmem:[%s108] sm:$0x1] %vm109, %v106
    $region49: #{tpu_custom_call.1} parent=1 // loop_footer
      %s101 = sadd.s32 1, %s97
    $region50: #{tpu_custom_call.1} parent=1 // loop_footer_branch
      %96 = sbr.rel target = $region46
    $region51: #{tpu_custom_call.1} parent=1 // loop_exit
      _
    %v111 = vld [vmem:[#allocation2] sm:$0xff]
    %v112 = vmul.f32 %v111, %v111
    %vm113 = vcmask 261120
    %v114 = vsel %vm113, %v112, 0.0
    %115 = vadd.xlane.f32.xlu0 %v114
    %v116 = vpop.xlane.xlu0 %115
    %v117 = vld [vmem:[#allocation3] sm:$0xff]
    %v118 = vmul.f32 %v111, %v117
    %v119 = vsel %vm113, %v118, 0.0
    %120 = vadd.xlane.f32.xlu0 %v119
    %v121 = vpop.xlane.xlu0 %120
    %v122 = vmul.f32 %v117, %v117
    %v123 = vsel %vm113, %v122, 0.0
    %124 = vadd.xlane.f32.xlu0 %v123
    %v125 = vpop.xlane.xlu0 %124
    %v126 = vadd.f32 %v116, %v125
    %v127 = vld [vmem:[#allocation3 + $0x8] sm:$0xff]
    %v128 = vmul.f32 %v111, %v127
    %v129 = vsel %vm113, %v128, 0.0
    %130 = vadd.xlane.f32.xlu0 %v129
    %v131 = vpop.xlane.xlu0 %130
    %v132 = vmul.f32 %v127, %v127
    %v133 = vsel %vm113, %v132, 0.0
    %134 = vadd.xlane.f32.xlu0 %v133
    %v135 = vpop.xlane.xlu0 %134
    %v136 = vadd.f32 %v126, %v135
    %v137 = vld [vmem:[#allocation3 + $0x10] sm:$0xff]
    %v138 = vmul.f32 %v111, %v137
    %v139 = vsel %vm113, %v138, 0.0
    %140 = vadd.xlane.f32.xlu0 %v139
    %v141 = vpop.xlane.xlu0 %140
    %v142 = vmul.f32 %v137, %v137
    %v143 = vsel %vm113, %v142, 0.0
    %144 = vadd.xlane.f32.xlu0 %v143
    %v145 = vpop.xlane.xlu0 %144
    %v146 = vadd.f32 %v136, %v145
    %v147 = vld [vmem:[#allocation3 + $0x18] sm:$0xff]
    %v148 = vmul.f32 %v111, %v147
    %v149 = vsel %vm113, %v148, 0.0
    %150 = vadd.xlane.f32.xlu0 %v149
    %v151 = vpop.xlane.xlu0 %150
    %v152 = vmul.f32 %v147, %v147
    %v153 = vsel %vm113, %v152, 0.0
    %154 = vadd.xlane.f32.xlu0 %v153
    %v155 = vpop.xlane.xlu0 %154
    %v156 = vadd.f32 %v146, %v155
    %v157 = vld [vmem:[#allocation3 + $0x20] sm:$0xff]
    %v158 = vmul.f32 %v111, %v157
    %v159 = vsel %vm113, %v158, 0.0
    %160 = vadd.xlane.f32.xlu0 %v159
    %v161 = vpop.xlane.xlu0 %160
    %v162 = vmul.f32 %v157, %v157
    %v163 = vsel %vm113, %v162, 0.0
    %164 = vadd.xlane.f32.xlu0 %v163
    %v165 = vpop.xlane.xlu0 %164
    %v166 = vadd.f32 %v156, %v165
    %v168 = vlaneseq
    %v169 = vand.u32 %v168, 127
    %v170 = vlaneseq
    %v171 = vshrl.u32 %v170, 7
    %v172 = vsub.s32 %v169, %v171
    %v173 = vrot.slane %v121, %v172
    %v176 = vlaneseq
    %v177 = vshrl.u32 %v176, 7
    %v178 = vsub.s32 %v169, %v177
    %v179 = vrot.slane %v131, %v178
    %v182 = vlaneseq
    %v183 = vshrl.u32 %v182, 7
    %v184 = vsub.s32 %v169, %v183
    %v185 = vrot.slane %v141, %v184
    %v188 = vlaneseq
    %v189 = vshrl.u32 %v188, 7
    %v190 = vsub.s32 %v169, %v189
    %v191 = vrot.slane %v151, %v190
    %v194 = vlaneseq
    %v195 = vshrl.u32 %v194, 7
    %v196 = vsub.s32 %v169, %v195
    %v197 = vrot.slane %v161, %v196
    %v200 = vlaneseq
    %v201 = vshrl.u32 %v200, 7
    %v202 = vsub.s32 %v169, %v201
    %v203 = vrot.slane %v166, %v202
    %vm205 = vcmask 1040384
    %v206 = vsel %vm205, %v173, %v179
    %vm207 = vcmask 1041408
    %v208 = vsel %vm207, %v206, %v185
    %vm209 = vcmask 1042432
    %v210 = vsel %vm209, %v208, %v191
    %vm211 = vcmask 1043456
    %v212 = vsel %vm211, %v210, %v197
    %vm213 = vcmask 1044480
    %v214 = vsel %vm213, %v212, %v203
    %vm215 = vcmask 62464
    %216 = vst.msk [vmem:[#allocation7] sm:$0x3f] %vm215, %v214
    // Predicated region
    $region52: #{tpu_custom_call.1} parent=1 // pred_check
      _
    $region53: #{tpu_custom_call.1} parent=1 // pred_check_branch
      %218 = sbr.rel (0) target = $region55
    $region54: #{tpu_custom_call.1} parent=1 // pred_region
      %s220 = ssub.s32 128, 128
      %221 = vsyncadd [#allocation8], %s220
      %s223 = sshll.u32 [#allocation7], 4
      %s224 = int_to_ptr.vmem [resolvable:$true] %s223
      %226 = dma.vmem_to_hbm [thread:$0]  %s224, 128, %s4, [#allocation8]
    $region55: #{tpu_custom_call.1} parent=1 // pred_fallthru
      _
    // Predicated region
    $region56: #{tpu_custom_call.1} parent=1 // pred_check
      _
    $region57: #{tpu_custom_call.1} parent=1 // pred_check_branch
      %228 = sbr.rel (0) target = $region59
    $region58: #{tpu_custom_call.1} parent=1 // pred_region
      %229 = dma.done [#allocation8], 128
    $region59: #{tpu_custom_call.1} parent=1 // pred_fallthru
      _
    %230 = vsyncpa [#allocation8], 1

</llo_original>
